<compile_context>
chip_gen: v5e
topology: v5e:2x2
jax: 0.10.0
libtpu: 0.0.40
codegen_flags: <defaults>
</compile_context>

<pallas_src>
import functools

import jax
import jax.numpy as jnp
from jax.experimental import pallas as pl
from jax.experimental.pallas import tpu as pltpu

_SUBLANES = 8
_LANES = 128


def _pinball_block_kernel(y_ref, t_ref, out_ref, *, q1, q2, block_rows, chunk,
                          rows_valid, ragged, unroll):
    """One grid step: reduce a (block_rows, cols) tile pair to a (1, 128) row.

    y_ref holds interleaved [lower, upper] predictions, t_ref the target
    duplicated into the same interleaved layout.  Even lanes use quantile q1,
    odd lanes q2.
    """
    i = pl.program_id(0)
    cols = y_ref.shape[1]

    # Per-lane quantile vector from lane parity (built once per grid step).
    lane = jax.lax.broadcasted_iota(jnp.int32, (chunk, cols), 1)
    q = jnp.where(lane % 2 == 0, jnp.float32(q1), jnp.float32(q2))
    qm1 = q - 1.0

    def chunk_pin(r0, masked):
        # Slice the *refs* (small, vreg-sized working set; no VMEM spills).
        y = y_ref[pl.ds(r0, chunk), :].astype(jnp.float32)
        t = t_ref[pl.ds(r0, chunk), :].astype(jnp.float32)
        d = t - y
        pin = jnp.maximum(q * d, qm1 * d)
        if masked:
            # Rows at/after rows_valid are out-of-bounds garbage from the
            # ragged last block; select them out (jnp.where does not propagate
            # values from the unselected branch).
            row = (jax.lax.broadcasted_iota(jnp.int32, (chunk, cols), 0)
                   + i * block_rows + r0)
            pin = jnp.where(row < rows_valid, pin, 0.0)
        return pin

    def fold(masked):
        ntrips = block_rows // chunk

        def body(c, acc):
            r0 = pl.multiple_of(c * chunk, chunk)
            return acc + chunk_pin(r0, masked)

        acc = jax.lax.fori_loop(0, ntrips, body,
                                jnp.zeros((chunk, cols), jnp.float32),
                                unroll=min(unroll, ntrips))
        # Small, once-per-block reduction to a lane-dense (1, 128) partial row.
        folded = acc[:, 0:_LANES]
        for s in range(_LANES, cols, _LANES):
            folded = folded + acc[:, s:s + _LANES]
        out_ref[...] = jnp.sum(folded, axis=0, keepdims=True)

    if ragged:
        last = pl.num_programs(0) - 1

        @pl.when(i < last)
        def _hot():
            fold(False)

        @pl.when(i == last)
        def _tail():
            fold(True)
    else:
        fold(False)


def quantile_loss(y_pred, target, coverage=0.9, penalty=0.0, *,
                  block_rows=2048, lanes_per_row=256):
    """y_pred: (N, 2) [lower, upper]; target: (N,). Returns scalar f32 loss."""
    # TODO(synk): the reference forward() body is `pass`; `penalty` has no
    # defined semantics in the source, so it is accepted but unused.
    del penalty
    assert y_pred.ndim == 2 and y_pred.shape[1] == 2, y_pred.shape
    assert target.shape[0] == y_pred.shape[0]
    assert block_rows % _SUBLANES == 0 and block_rows >= _SUBLANES
    assert lanes_per_row % _LANES == 0 and lanes_per_row >= 2 * _LANES

    # coverage is fixed at module construction (PyTorch __init__), so q1/q2 are
    # baked as compile-time constants; if it ever varied per call, pass them as
    # SMEM scalars via PrefetchScalarGridSpec(num_scalar_prefetch=1) instead.
    q1 = (1.0 - coverage) / 2.0
    q2 = 1.0 - (1.0 - coverage) / 2.0

    n = target.shape[0]
    cols = lanes_per_row            # slab lanes per row (interleaved lo/hi)
    elems_per_row = cols // 2       # samples per slab row

    rows = max(pl.cdiv(n, elems_per_row), _SUBLANES)

    # y_pred is row-major (N, 2) -> flat [lo0, hi0, lo1, hi1, ...]: no gather,
    # the reshape below is a free metadata change when no padding is needed.
    y_flat = y_pred.reshape(-1)
    # Duplicate the target into the same interleaved layout with one gather-free
    # XLA broadcast (the only remaining HBM prep traffic).
    t_flat = jnp.broadcast_to(target[:, None], (n, 2)).reshape(-1)

    padded = rows * cols
    if padded != 2 * n:
        # Zero padding contributes exactly 0 to the pinball sum.
        y_flat = jnp.pad(y_flat, (0, padded - 2 * n))
        t_flat = jnp.pad(t_flat, (0, padded - 2 * n))
    y_slab = y_flat.reshape(rows, cols)
    t_slab = t_flat.reshape(rows, cols)

    # Block geometry: br % 8 == 0 and br <= rows so blocks never exceed the
    # array; a ragged last block (rows % br != 0) is masked in-kernel.
    br = min(block_rows, (rows // _SUBLANES) * _SUBLANES)
    chunk = 16 if br % 16 == 0 else _SUBLANES
    nblk = pl.cdiv(rows, br)
    ragged = (rows % br) != 0

    kern = functools.partial(
        _pinball_block_kernel, q1=q1, q2=q2, block_rows=br, chunk=chunk,
        rows_valid=rows, ragged=ragged, unroll=4)

    tile = pl.BlockSpec((br, cols), lambda i: (i, 0))
    partials = pl.pallas_call(
        kern,
        out_shape=jax.ShapeDtypeStruct((nblk, _LANES), jnp.float32),
        grid_spec=pltpu.PrefetchScalarGridSpec(
            num_scalar_prefetch=0,
            grid=(nblk,),
            in_specs=[tile, tile],
            out_specs=pl.BlockSpec((1, _LANES), lambda i: (i, 0)),
        ),
        compiler_params=pltpu.CompilerParams(
            # Independent per-block partials: shard across TensorCores (v7x).
            dimension_semantics=("parallel",),
        ),
    )(y_slab, t_slab)

    # Tiny final reduction and the 1/N scale on the (nblk, 128) partials.
    return jnp.sum(partials) / jnp.float32(n)


def _reference(y_pred, target, coverage=0.9):
    q1 = (1.0 - coverage) / 2.0
    q2 = 1.0 - (1.0 - coverage) / 2.0
    y_lo = y_pred[:, 0].astype(jnp.float32)
    y_hi = y_pred[:, 1].astype(jnp.float32)
    t = target.astype(jnp.float32)
    d_lo = t - y_lo
    d_hi = t - y_hi
    pin_lo = jnp.maximum(q1 * d_lo, (q1 - 1.0) * d_lo)
    pin_hi = jnp.maximum(q2 * d_hi, (q2 - 1.0) * d_hi)
    return jnp.mean(pin_lo + pin_hi)


if __name__ == "__main__":
    key = jax.random.PRNGKey(0)
    k1, k2, k3, k4 = jax.random.split(key, 4)
    coverage = 0.9

    # Small demo shape (padded-slab path).
    N = 256
    y_pred = jax.random.normal(k1, (N, 2), dtype=jnp.float32)
    target = jax.random.normal(k2, (N,), dtype=jnp.float32)
    out = jax.block_until_ready(
        quantile_loss(y_pred, target, coverage=coverage, penalty=0.0))
    ref = jax.block_until_ready(_reference(y_pred, target, coverage=coverage))
    assert jnp.allclose(out, ref, rtol=1e-5, atol=1e-5), (out, ref)

    # Ragged shape exercising the masked tail block (rows % block_rows != 0).
    N2 = 1280
    y_pred2 = jax.random.normal(k3, (N2, 2), dtype=jnp.float32)
    target2 = jax.random.normal(k4, (N2,), dtype=jnp.float32)
    out2 = jax.block_until_ready(
        quantile_loss(y_pred2, target2, coverage=coverage, penalty=0.0))
    ref2 = jax.block_until_ready(_reference(y_pred2, target2, coverage=coverage))
    assert jnp.allclose(out2, ref2, rtol=1e-5, atol=1e-5), (out2, ref2)

    print("KERNEL_OK")
</pallas_src>

<mosaic_0001>
module attributes {stable_mosaic.version = 11 : i64} {
  func.func @_pinball_block_kernel(%arg0: i32, %arg1: memref<8x256xf32, #tpu.memory_space<vmem>>, %arg2: memref<8x256xf32, #tpu.memory_space<vmem>>, %arg3: memref<1x128xf32, #tpu.memory_space<vmem>>) attributes {dimension_semantics = [#tpu.dimension_semantics<parallel>], iteration_bounds = array<i64: 1>, scalar_prefetch = 0 : i64, scratch_operands = 0 : i64, tpu.core_type = #tpu.core_type<tc>, window_params = [{transform_indices = @transform_0, window_bounds = array<i64: 8, 256>}, {transform_indices = @transform_1, window_bounds = array<i64: 8, 256>}, {transform_indices = @transform_2, window_bounds = array<i64: 1, 128>}]} {
    %0 = tpu.iota {dimensions = array<i32: 1>} : vector<8x256xi32>
    %c2_i32 = arith.constant 2 : i32
    %c0_i32 = arith.constant 0 : i32
    %1 = arith.cmpi eq, %c2_i32, %c0_i32 : i32
    %c1_i32 = arith.constant 1 : i32
    %2 = arith.select %1, %c1_i32, %c2_i32 : i32
    %3 = vector.broadcast %2 : i32 to vector<8x256xi32>
    %4 = arith.remsi %0, %3 : vector<8x256xi32>
    %c0_i32_0 = arith.constant 0 : i32
    %5 = vector.broadcast %c0_i32_0 : i32 to vector<8x256xi32>
    %6 = arith.cmpi ne, %4, %5 : vector<8x256xi32>
    %c0_i32_1 = arith.constant 0 : i32
    %7 = vector.broadcast %c0_i32_1 : i32 to vector<8x256xi32>
    %8 = arith.cmpi slt, %4, %7 : vector<8x256xi32>
    %c0_i32_2 = arith.constant 0 : i32
    %9 = arith.cmpi slt, %2, %c0_i32_2 : i32
    %10 = vector.broadcast %9 : i1 to vector<8x256xi1>
    %11 = vector.broadcast %10 : vector<8x256xi1> to vector<8x256xi1>
    %12 = arith.xori %8, %11 : vector<8x256xi1>
    %13 = arith.andi %12, %6 : vector<8x256xi1>
    %14 = vector.broadcast %2 : i32 to vector<8x256xi32>
    %15 = arith.addi %4, %14 : vector<8x256xi32>
    %16 = arith.select %13, %15, %4 : vector<8x256xi1>, vector<8x256xi32>
    %c0_i32_3 = arith.constant 0 : i32
    %17 = vector.broadcast %c0_i32_3 : i32 to vector<8x256xi32>
    %18 = arith.cmpi eq, %16, %17 : vector<8x256xi32>
    %cst = arith.constant 5.000000e-02 : f32
    %cst_4 = arith.constant 0.949999988 : f32
    %19 = vector.broadcast %cst : f32 to vector<8x256xf32>
    %20 = vector.broadcast %cst_4 : f32 to vector<8x256xf32>
    %21 = arith.select %18, %19, %20 : vector<8x256xi1>, vector<8x256xf32>
    %cst_5 = arith.constant 1.000000e+00 : f32
    %22 = vector.broadcast %cst_5 : f32 to vector<8x256xf32>
    %23 = arith.subf %21, %22 : vector<8x256xf32>
    %cst_6 = arith.constant 0.000000e+00 : f32
    %24 = vector.broadcast %cst_6 : f32 to vector<8x256xf32>
    %c0_i32_7 = arith.constant 0 : i32
    %c8_i32 = arith.constant 8 : i32
    %25 = arith.muli %c0_i32_7, %c8_i32 : i32
    %26 = tpu.assume_multiple %25, 8 : i32
    %27 = arith.index_cast %26 : i32 to index
    %c0 = arith.constant 0 : index
    %28 = vector.load %arg1[%27, %c0] : memref<8x256xf32, #tpu.memory_space<vmem>>, vector<8x256xf32>
    %29 = arith.index_cast %26 : i32 to index
    %c0_8 = arith.constant 0 : index
    %30 = vector.load %arg2[%29, %c0_8] : memref<8x256xf32, #tpu.memory_space<vmem>>, vector<8x256xf32>
    %31 = arith.subf %30, %28 : vector<8x256xf32>
    %32 = arith.mulf %21, %31 : vector<8x256xf32>
    %33 = arith.mulf %23, %31 : vector<8x256xf32>
    %34 = arith.maximumf %32, %33 : vector<8x256xf32>
    %35 = arith.addf %24, %34 : vector<8x256xf32>
    %c1_i32_9 = arith.constant 1 : i32
    %36 = vector.extract_strided_slice %35 {offsets = [0, 0], sizes = [8, 128], strides = [1, 1]} : vector<8x256xf32> to vector<8x128xf32>
    %37 = vector.extract_strided_slice %35 {offsets = [0, 128], sizes = [8, 128], strides = [1, 1]} : vector<8x256xf32> to vector<8x128xf32>
    %38 = arith.addf %36, %37 : vector<8x128xf32>
    %cst_10 = arith.constant dense<0.000000e+00> : vector<128xf32>
    %39 = vector.multi_reduction <add>, %38, %cst_10 [0] : vector<8x128xf32> to vector<128xf32>
    %40 = vector.shape_cast %39 : vector<128xf32> to vector<1x128xf32>
    %c0_11 = arith.constant 0 : index
    %c0_12 = arith.constant 0 : index
    %41 = vector.load %arg3[%c0_11, %c0_12] : memref<1x128xf32, #tpu.memory_space<vmem>>, vector<1x128xf32>
    tpu.vector_store %arg3[%c0_11, %c0_12], %40 {strides = array<i32>} : memref<1x128xf32, #tpu.memory_space<vmem>>, vector<1x128xf32>,
    return
  }
  func.func @transform_0(%arg0: i32) -> (i32, i32) {
    %c0_i32 = arith.constant 0 : i32
    %c0_i32_0 = arith.constant 0 : i32
    return %arg0, %c0_i32 : i32, i32
  }
  func.func @transform_1(%arg0: i32) -> (i32, i32) {
    %c0_i32 = arith.constant 0 : i32
    %c0_i32_0 = arith.constant 0 : i32
    return %arg0, %c0_i32 : i32, i32
  }
  func.func @transform_2(%arg0: i32) -> (i32, i32) {
    %c0_i32 = arith.constant 0 : i32
    %c0_i32_0 = arith.constant 0 : i32
    return %arg0, %c0_i32 : i32, i32
  }
}

</mosaic_0001>

<llo_original>
// kernel: tpu_custom_call.1
$region0: #{tpu_custom_call.1}
  #allocation0 [shape = 'u32[]', space=smem, size = 0x4, offset = 0x4, fixed_abs, tag = 'smem constant byte address 0x4 - core index']
  #allocation1 [shape = 'u32[72,128]{1,0:T(1,128)}', space=vmem, size = 0x9000, scoped, tag = 'internal scratch']
  %s0 = inlined_call_operand.hbm [shape: f32[8,256], index: 0, kind: input, shape index: {}]
  %s1 = inlined_call_operand.hbm [shape: f32[8,256], index: 1, kind: input, shape index: {}]
  %s2 = inlined_call_operand.hbm [shape: f32[1,128], index: 2, kind: output, shape index: {}]
  %s3 = sld [smem:[#allocation0]]
  $region26: #{tpu_custom_call.1} parent=0
    _
  %s5 = ssub.s32 1, %s3
  %s6 = scalar_select 0, %s5, %s3
  $region1: #{tpu_custom_call.1} parent=0
    #allocation2 [shape = 'u8[8192]{0}', space=vmem, size = 0x2000, scoped, tag = 'input window, operand 0, single buffered']
    #allocation3 [shape = 's32[1]{0}', space=sflag, size = 0x4, scoped, tag = 'scoped memory for tpu_custom_call.1']
    #allocation4 [shape = 's32[1]{0}', space=sflag, size = 0x4, scoped, tag = 'scoped memory for tpu_custom_call.1']
    #allocation5 [shape = 'u8[8192]{0}', space=vmem, size = 0x2000, scoped, tag = 'input window, operand 1, single buffered']
    #allocation6 [shape = 's32[1]{0}', space=sflag, size = 0x4, scoped, tag = 'scoped memory for tpu_custom_call.1']
    #allocation7 [shape = 'u8[512]{0}', space=vmem, size = 0x400, scoped, tag = 'output window, operand 0, single buffered']
    %7 = vsyncpa [#allocation3], 0
    %8 = vsyncpa [#allocation6], 0
    %9 = vsyncpa [#allocation4], 0
    // Predicated region
    $region2: #{tpu_custom_call.1} parent=1 // pred_check
      _
    $region3: #{tpu_custom_call.1} parent=1 // pred_check_branch
      %11 = sbr.rel (0) target = $region5
    $region4: #{tpu_custom_call.1} parent=1 // pred_region
      %13 = vsyncadd [#allocation3], 0
      %s15 = sshll.u32 %s0, 4
      %s16 = int_to_ptr.hbm [resolvable:$true] %s15
      %s17 = sshll.u32 [#allocation2], 4
      %s18 = int_to_ptr.vmem [resolvable:$true] %s17
      %20 = dma.hbm_to_vmem [thread:$0]  %s16, 256, %s18, [#allocation3]
    $region5: #{tpu_custom_call.1} parent=1 // pred_fallthru
      _
    // Predicated region
    $region6: #{tpu_custom_call.1} parent=1 // pred_check
      _
    $region7: #{tpu_custom_call.1} parent=1 // pred_check_branch
      %22 = sbr.rel (0) target = $region9
    $region8: #{tpu_custom_call.1} parent=1 // pred_region
      %24 = vsyncadd [#allocation6], 0
      %s26 = sshll.u32 %s1, 4
      %s27 = int_to_ptr.hbm [resolvable:$true] %s26
      %s28 = sshll.u32 [#allocation5], 4
      %s29 = int_to_ptr.vmem [resolvable:$true] %s28
      %31 = dma.hbm_to_vmem [thread:$0]  %s27, 256, %s29, [#allocation6]
    $region9: #{tpu_custom_call.1} parent=1 // pred_fallthru
      _
    // Predicated region
    $region10: #{tpu_custom_call.1} parent=1 // pred_check
      _
    $region11: #{tpu_custom_call.1} parent=1 // pred_check_branch
      %33 = sbr.rel (0) target = $region13
    $region12: #{tpu_custom_call.1} parent=1 // pred_region
      %35 = dma.done [#allocation3], 256
    $region13: #{tpu_custom_call.1} parent=1 // pred_fallthru
      _
    // Predicated region
    $region14: #{tpu_custom_call.1} parent=1 // pred_check
      _
    $region15: #{tpu_custom_call.1} parent=1 // pred_check_branch
      %37 = sbr.rel (0) target = $region17
    $region16: #{tpu_custom_call.1} parent=1 // pred_region
      %39 = dma.done [#allocation6], 256
    $region17: #{tpu_custom_call.1} parent=1 // pred_fallthru
      _
    %v40 = vlaneseq
    %v41 = vand.u32 %v40, 127
    %v42 = vadd.s32 %v41, 128
    %vm43 = vcmp.lt.s32.totalorder %v41, 0
    %v44 = vsub.s32 0, %v41
    %v45 = vsel %vm43, %v44, %v41
    %v46 = vshrl.u32 %v45, 1
    %v47 = vand.u32 %v45, 1
    %v48 = vsub.s32 0, %v47
    %v49 = vsel %vm43, %v48, %v47
    %vm50 = vcmp.lt.s32.totalorder %v42, 0
    %v51 = vsub.s32 0, %v42
    %v52 = vsel %vm50, %v51, %v42
    %v53 = vshrl.u32 %v52, 1
    %v54 = vand.u32 %v52, 1
    %v55 = vsub.s32 0, %v54
    %v56 = vsel %vm50, %v55, %v54
    %vm57 = vcmp.ne.s32.totalorder %v49, 0
    %vm58 = vcmp.ne.s32.totalorder %v56, 0
    %vm59 = vcmp.lt.s32.totalorder %v49, 0
    %vm60 = vcmp.lt.s32.totalorder %v56, 0
    %vm61 = vmand %vm59, %vm57
    %vm62 = vmand %vm60, %vm58
    %v63 = vadd.s32 %v49, 2
    %v64 = vadd.s32 %v56, 2
    %v65 = vsel %vm61, %v63, %v49
    %v66 = vsel %vm62, %v64, %v56
    %vm67 = vcmp.eq.s32.totalorder %v65, 0
    %vm68 = vcmp.eq.s32.totalorder %v66, 0
    %v69 = vsel %vm67, 0.05, 0.95
    %v70 = vsel %vm68, 0.05, 0.95
    %v71 = vsub.f32 %v69, 1.0
    %v72 = vsub.f32 %v70, 1.0
    %s73 = smul.u32 0, 2
    %s74 = smul.addr %s73, 8
    %s75 = scalar_lea.vmem [#allocation2], %s74
    %v76 = vld [vmem:[%s75] sm:$0xff]
    %v77 = vld [vmem:[%s75 + $0x8] sm:$0xff]
    %s78 = smul.addr %s73, 8
    %s79 = scalar_lea.vmem [#allocation5], %s78
    %v80 = vld [vmem:[%s79] sm:$0xff]
    %v81 = vld [vmem:[%s79 + $0x8] sm:$0xff]
    %v82 = vsub.f32 %v80, %v76
    %v83 = vsub.f32 %v81, %v77
    %v84 = vmul.f32 %v69, %v82
    %v85 = vmul.f32 %v70, %v83
    %v86 = vmul.f32 %v71, %v82
    %v87 = vmul.f32 %v72, %v83
    %v88 = vmax.f32 %v84, %v86
    %v89 = vmax.f32 %v85, %v87
    %v90 = vadd.f32 %v88, 0.0
    %v91 = vadd.f32 %v89, 0.0
    %v92 = vadd.f32 %v90, %v91
    %v93 = vrot.slane %v92, 4
    %v94 = vadd.f32 %v92, %v93
    %v95 = vrot.slane %v94, 2
    %v96 = vadd.f32 %v94, %v95
    %v97 = vrot.slane %v96, 1
    %v98 = vadd.f32 %v96, %v97
    %99 = vst [vmem:[#allocation7] sm:$0x1] %v98
    // Predicated region
    $region18: #{tpu_custom_call.1} parent=1 // pred_check
      _
    $region19: #{tpu_custom_call.1} parent=1 // pred_check_branch
      %101 = sbr.rel (0) target = $region21
    $region20: #{tpu_custom_call.1} parent=1 // pred_region
      %103 = vsyncadd [#allocation4], 0
      %s105 = sshll.u32 [#allocation7], 4
      %s106 = int_to_ptr.vmem [resolvable:$true] %s105
      %s107 = sshll.u32 %s2, 4
      %s108 = int_to_ptr.hbm [resolvable:$true] %s107
      %110 = dma.vmem_to_hbm [thread:$0]  %s106, 16, %s108, [#allocation4]
    $region21: #{tpu_custom_call.1} parent=1 // pred_fallthru
      _
    // Predicated region
    $region22: #{tpu_custom_call.1} parent=1 // pred_check
      _
    $region23: #{tpu_custom_call.1} parent=1 // pred_check_branch
      %112 = sbr.rel (0) target = $region25
    $region24: #{tpu_custom_call.1} parent=1 // pred_region
      %114 = dma.done [#allocation4], 16
    $region25: #{tpu_custom_call.1} parent=1 // pred_fallthru
      _
    %115 = vsyncpa [#allocation3], 1
    %116 = vsyncpa [#allocation6], 1
    %117 = vsyncpa [#allocation4], 1

</llo_original>
